<compile_context>
chip_gen: v7x
topology: tpu7x:2x2x1
jax: 0.10.0
libtpu: 0.0.40
codegen_flags: <defaults>
</compile_context>

<pallas_src>
import functools

import jax
import jax.numpy as jnp
from jax.experimental import pallas as pl
from jax.experimental.pallas import tpu as pltpu


def _sobelxy_kernel(x_ref, o_ref, *, width):
    # x_ref / o_ref: (tb, H*W) float32 blocks — one flattened image per row.
    x = x_ref[...]
    _, hw = x.shape
    w = width

    # Border masks on the fused (flattened) lane axis.  They zero out both the
    # circular wrap of pltpu.roll and the conv's padding=1 zero border.
    lane = jax.lax.broadcasted_iota(jnp.int32, (1, hw), 1)
    col = lane % w
    left_edge = col == 0            # j == 0      -> x[i, j-1] is padding
    right_edge = col == (w - 1)     # j == W-1    -> x[i, j+1] is padding
    top_row = lane < w              # i == 0      -> row i-1 is padding
    bot_row = lane >= (hw - w)      # i == H-1    -> row i+1 is padding

    zero = jnp.zeros((), x.dtype)

    # --- +/-1 column shifts (lane rolls, XLU) with zero fill == padding=1 ---
    xl = jnp.where(left_edge, zero, pltpu.roll(x, 1, axis=1))         # x[i, j-1]
    xr = jnp.where(right_edge, zero, pltpu.roll(x, hw - 1, axis=1))   # x[i, j+1]

    # Separable row passes (shared by both filters); xl/xr/x dead afterwards.
    d = xr - xl                  # row kernel [-1, 0, 1]  -> feeds Gx
    s = xl + 2.0 * x + xr        # row kernel [ 1, 2, 1]  -> feeds Gy

    # --- +/-1 row shifts == +/-W lane shifts on the flattened axis ---------
    # Finish Gx first so d / d_up / d_dn retire before the Gy temporaries.
    d_up = jnp.where(top_row, zero, pltpu.roll(d, w, axis=1))         # d[i-1, j]
    d_dn = jnp.where(bot_row, zero, pltpu.roll(d, hw - w, axis=1))    # d[i+1, j]
    res = jnp.abs(d_up + 2.0 * d + d_dn)                              # |Gx|

    s_up = jnp.where(top_row, zero, pltpu.roll(s, w, axis=1))         # s[i-1, j]
    s_dn = jnp.where(bot_row, zero, pltpu.roll(s, hw - w, axis=1))    # s[i+1, j]
    o_ref[...] = res + jnp.abs(s_up - s_dn)                           # + |Gy|


def sobelxy(x, *, tb=None, vmem_limit_bytes=None):
    """x: (N, 1, H, W) float32 -> (N, 1, H, W) float32, same as Sobelxy.forward."""
    N, C, H, W = x.shape
    assert C == 1, "reference conv weights have in_channels=1"
    NC = N * C
    HW = H * W

    x_flat = x.reshape(NC, HW)           # lane-dense: one flattened image per row
    row_bytes = HW * x.dtype.itemsize

    if tb is None:
        # ~2 MiB of input per block: large enough to amortize per-step overhead
        # and sit near the HBM roofline, small enough that 2x(in)+2x(out)
        # double-buffered blocks plus ~5 live block-sized temporaries fit
        # every generation's VMEM (incl. v7x's 64 MiB).
        target_bytes = 2 << 20
        tb = max(1, target_bytes // max(1, row_bytes))
        if tb >= NC:
            # Whole batch fits in one block.  If the batch is big enough, split
            # it so the "parallel" grid axis has >= 2 steps (keeps both v7x
            # TensorCores busy); otherwise take the whole batch in one step.
            tb = ((NC + 15) // 16) * 8 if NC >= 16 else NC
        elif tb >= 8:
            tb = (tb // 8) * 8           # sublane-aligned tiles when tiling
        # else (tb in [1, 7]): single images are already MB-scale; keep as-is.
        # TODO(synk): row-tile with 1-row halo for very large single images.
    tb = int(min(max(tb, 1), NC))

    grid = (pl.cdiv(NC, tb),)

    if vmem_limit_bytes is None:
        # Generation-aware scoped-VMEM limit: ~3/4 of physical, capped at
        # 96 MiB (v5e/v6e: 128 MiB -> 96 MiB; v7x: 64 MiB -> 48 MiB).
        try:
            vmem_phys = int(pltpu.get_tpu_info().vmem_capacity_bytes)
        except Exception:
            vmem_phys = 64 << 20
        vmem_limit_bytes = min((vmem_phys * 3) // 4, 96 << 20)

    out = pl.pallas_call(
        functools.partial(_sobelxy_kernel, width=W),
        out_shape=jax.ShapeDtypeStruct((NC, HW), x.dtype),
        grid_spec=pltpu.PrefetchScalarGridSpec(
            num_scalar_prefetch=0,
            grid=grid,
            in_specs=[pl.BlockSpec((tb, HW), lambda n: (n, 0))],
            out_specs=pl.BlockSpec((tb, HW), lambda n: (n, 0)),
        ),
        compiler_params=pltpu.CompilerParams(
            dimension_semantics=("parallel",),
            vmem_limit_bytes=int(vmem_limit_bytes),
        ),
    )(x_flat)

    return out.reshape(N, C, H, W)


def _sobelxy_reference(x):
    """Pure-JAX reference (same math as F.conv2d with the two Sobel kernels)."""
    kx = jnp.array([[-1, 0, 1], [-2, 0, 2], [-1, 0, 1]], dtype=x.dtype)
    ky = jnp.array([[1, 2, 1], [0, 0, 0], [-1, -2, -1]], dtype=x.dtype)
    wx = kx[None, None]
    wy = ky[None, None]
    dn = jax.lax.conv_dimension_numbers(x.shape, wx.shape, ("NCHW", "OIHW", "NCHW"))
    sx = jax.lax.conv_general_dilated(x, wx, (1, 1), ((1, 1), (1, 1)),
                                      dimension_numbers=dn)
    sy = jax.lax.conv_general_dilated(x, wy, (1, 1), ((1, 1), (1, 1)),
                                      dimension_numbers=dn)
    return jnp.abs(sx) + jnp.abs(sy)


if __name__ == "__main__":
    key = jax.random.PRNGKey(0)
    x = jax.random.normal(key, (2, 1, 16, 16), dtype=jnp.float32)

    out = sobelxy(x)
    jax.block_until_ready(out)

    ref = _sobelxy_reference(x)
    assert out.shape == (2, 1, 16, 16)
    assert jnp.allclose(out, ref, atol=1e-5), "mismatch vs reference conv"

    print("KERNEL_OK")
</pallas_src>

<mosaic_0001>
module attributes {stable_mosaic.version = 11 : i64} {
  func.func @_sobelxy_kernel(%arg0: i32, %arg1: memref<2x256xf32, #tpu.memory_space<vmem>>, %arg2: memref<2x256xf32, #tpu.memory_space<vmem>>) attributes {dimension_semantics = [#tpu.dimension_semantics<parallel>], iteration_bounds = array<i64: 1>, scalar_prefetch = 0 : i64, scratch_operands = 0 : i64, tpu.core_type = #tpu.core_type<tc>, window_params = [{transform_indices = @transform_0, window_bounds = array<i64: 2, 256>}, {transform_indices = @transform_1, window_bounds = array<i64: 2, 256>}]} {
    %c0 = arith.constant 0 : index
    %c0_0 = arith.constant 0 : index
    %0 = vector.load %arg1[%c0, %c0_0] : memref<2x256xf32, #tpu.memory_space<vmem>>, vector<2x256xf32>
    %1 = tpu.iota {dimensions = array<i32: 1>} : vector<1x256xi32>
    %c16_i32 = arith.constant 16 : i32
    %c0_i32 = arith.constant 0 : i32
    %2 = arith.cmpi eq, %c16_i32, %c0_i32 : i32
    %c1_i32 = arith.constant 1 : i32
    %3 = arith.select %2, %c1_i32, %c16_i32 : i32
    %4 = vector.broadcast %3 : i32 to vector<1x256xi32>
    %5 = arith.remsi %1, %4 : vector<1x256xi32>
    %c0_i32_1 = arith.constant 0 : i32
    %6 = vector.broadcast %c0_i32_1 : i32 to vector<1x256xi32>
    %7 = arith.cmpi ne, %5, %6 : vector<1x256xi32>
    %c0_i32_2 = arith.constant 0 : i32
    %8 = vector.broadcast %c0_i32_2 : i32 to vector<1x256xi32>
    %9 = arith.cmpi slt, %5, %8 : vector<1x256xi32>
    %c0_i32_3 = arith.constant 0 : i32
    %10 = arith.cmpi slt, %3, %c0_i32_3 : i32
    %11 = vector.broadcast %10 : i1 to vector<1x256xi1>
    %12 = vector.broadcast %11 : vector<1x256xi1> to vector<1x256xi1>
    %13 = arith.xori %9, %12 : vector<1x256xi1>
    %14 = arith.andi %13, %7 : vector<1x256xi1>
    %15 = vector.broadcast %3 : i32 to vector<1x256xi32>
    %16 = arith.addi %5, %15 : vector<1x256xi32>
    %17 = arith.select %14, %16, %5 : vector<1x256xi1>, vector<1x256xi32>
    %c0_i32_4 = arith.constant 0 : i32
    %18 = vector.broadcast %c0_i32_4 : i32 to vector<1x256xi32>
    %19 = arith.cmpi eq, %17, %18 : vector<1x256xi32>
    %c15_i32 = arith.constant 15 : i32
    %20 = vector.broadcast %c15_i32 : i32 to vector<1x256xi32>
    %21 = arith.cmpi eq, %17, %20 : vector<1x256xi32>
    %c16_i32_5 = arith.constant 16 : i32
    %22 = vector.broadcast %c16_i32_5 : i32 to vector<1x256xi32>
    %23 = arith.cmpi slt, %1, %22 : vector<1x256xi32>
    %c240_i32 = arith.constant 240 : i32
    %24 = vector.broadcast %c240_i32 : i32 to vector<1x256xi32>
    %25 = arith.cmpi sge, %1, %24 : vector<1x256xi32>
    %c1_i32_6 = arith.constant 1 : i32
    %26 = tpu.dynamic_rotate %0 by %c1_i32_6 dim 1 : vector<2x256xf32>, i32 -> vector<2x256xf32>
    %cst = arith.constant 0.000000e+00 : f32
    %27 = vector.shape_cast %19 : vector<1x256xi1> to vector<1x256xi1>
    %28 = vector.broadcast %27 : vector<1x256xi1> to vector<2x256xi1>
    %29 = vector.broadcast %cst : f32 to vector<2x256xf32>
    %30 = arith.select %28, %29, %26 : vector<2x256xi1>, vector<2x256xf32>
    %c255_i32 = arith.constant 255 : i32
    %31 = tpu.dynamic_rotate %0 by %c255_i32 dim 1 : vector<2x256xf32>, i32 -> vector<2x256xf32>
    %cst_7 = arith.constant 0.000000e+00 : f32
    %32 = vector.shape_cast %21 : vector<1x256xi1> to vector<1x256xi1>
    %33 = vector.broadcast %32 : vector<1x256xi1> to vector<2x256xi1>
    %34 = vector.broadcast %cst_7 : f32 to vector<2x256xf32>
    %35 = arith.select %33, %34, %31 : vector<2x256xi1>, vector<2x256xf32>
    %36 = arith.subf %35, %30 : vector<2x256xf32>
    %cst_8 = arith.constant 2.000000e+00 : f32
    %37 = vector.broadcast %cst_8 : f32 to vector<2x256xf32>
    %38 = arith.mulf %37, %0 : vector<2x256xf32>
    %39 = arith.addf %30, %38 : vector<2x256xf32>
    %40 = arith.addf %39, %35 : vector<2x256xf32>
    %c16_i32_9 = arith.constant 16 : i32
    %41 = tpu.dynamic_rotate %36 by %c16_i32_9 dim 1 : vector<2x256xf32>, i32 -> vector<2x256xf32>
    %cst_10 = arith.constant 0.000000e+00 : f32
    %42 = vector.shape_cast %23 : vector<1x256xi1> to vector<1x256xi1>
    %43 = vector.broadcast %42 : vector<1x256xi1> to vector<2x256xi1>
    %44 = vector.broadcast %cst_10 : f32 to vector<2x256xf32>
    %45 = arith.select %43, %44, %41 : vector<2x256xi1>, vector<2x256xf32>
    %c240_i32_11 = arith.constant 240 : i32
    %46 = tpu.dynamic_rotate %36 by %c240_i32_11 dim 1 : vector<2x256xf32>, i32 -> vector<2x256xf32>
    %cst_12 = arith.constant 0.000000e+00 : f32
    %47 = vector.shape_cast %25 : vector<1x256xi1> to vector<1x256xi1>
    %48 = vector.broadcast %47 : vector<1x256xi1> to vector<2x256xi1>
    %49 = vector.broadcast %cst_12 : f32 to vector<2x256xf32>
    %50 = arith.select %48, %49, %46 : vector<2x256xi1>, vector<2x256xf32>
    %cst_13 = arith.constant 2.000000e+00 : f32
    %51 = vector.broadcast %cst_13 : f32 to vector<2x256xf32>
    %52 = arith.mulf %51, %36 : vector<2x256xf32>
    %53 = arith.addf %45, %52 : vector<2x256xf32>
    %54 = arith.addf %53, %50 : vector<2x256xf32>
    %55 = math.absf %54 : vector<2x256xf32>
    %c16_i32_14 = arith.constant 16 : i32
    %56 = tpu.dynamic_rotate %40 by %c16_i32_14 dim 1 : vector<2x256xf32>, i32 -> vector<2x256xf32>
    %cst_15 = arith.constant 0.000000e+00 : f32
    %57 = vector.shape_cast %23 : vector<1x256xi1> to vector<1x256xi1>
    %58 = vector.broadcast %57 : vector<1x256xi1> to vector<2x256xi1>
    %59 = vector.broadcast %cst_15 : f32 to vector<2x256xf32>
    %60 = arith.select %58, %59, %56 : vector<2x256xi1>, vector<2x256xf32>
    %c240_i32_16 = arith.constant 240 : i32
    %61 = tpu.dynamic_rotate %40 by %c240_i32_16 dim 1 : vector<2x256xf32>, i32 -> vector<2x256xf32>
    %cst_17 = arith.constant 0.000000e+00 : f32
    %62 = vector.shape_cast %25 : vector<1x256xi1> to vector<1x256xi1>
    %63 = vector.broadcast %62 : vector<1x256xi1> to vector<2x256xi1>
    %64 = vector.broadcast %cst_17 : f32 to vector<2x256xf32>
    %65 = arith.select %63, %64, %61 : vector<2x256xi1>, vector<2x256xf32>
    %66 = arith.subf %60, %65 : vector<2x256xf32>
    %67 = math.absf %66 : vector<2x256xf32>
    %68 = arith.addf %55, %67 : vector<2x256xf32>
    %c0_18 = arith.constant 0 : index
    %c0_19 = arith.constant 0 : index
    %69 = vector.load %arg2[%c0_18, %c0_19] : memref<2x256xf32, #tpu.memory_space<vmem>>, vector<2x256xf32>
    tpu.vector_store %arg2[%c0_18, %c0_19], %68 {strides = array<i32>} : memref<2x256xf32, #tpu.memory_space<vmem>>, vector<2x256xf32>,
    return
  }
  func.func @transform_0(%arg0: i32) -> (i32, i32) {
    %c0_i32 = arith.constant 0 : i32
    %c0_i32_0 = arith.constant 0 : i32
    return %arg0, %c0_i32 : i32, i32
  }
  func.func @transform_1(%arg0: i32) -> (i32, i32) {
    %c0_i32 = arith.constant 0 : i32
    %c0_i32_0 = arith.constant 0 : i32
    return %arg0, %c0_i32 : i32, i32
  }
}

</mosaic_0001>

<llo_original>
// kernel: tpu_custom_call.1
$region0: #{tpu_custom_call.1}
  #allocation0 [shape = 'u32[]', space=smem, size = 0x4, offset = 0x4, fixed_abs, tag = 'smem constant byte address 0x4 - core index']
  #allocation1 [shape = 'u32[144,128]{1,0:T(1,128)}', space=vmem, size = 0x12000, scoped, tag = 'internal scratch']
  %s0 = inlined_call_operand.hbm [shape: f32[2,256], index: 0, kind: input, shape index: {}]
  %s1 = inlined_call_operand.hbm [shape: f32[2,256], index: 1, kind: output, shape index: {}]
  %s2 = sld [smem:[#allocation0]]
  $region18: #{tpu_custom_call.1} parent=0
    _
  %s4 = ssub.s32 1, %s2
  %s5 = scalar_select 0, %s4, %s2
  $region1: #{tpu_custom_call.1} parent=0
    #allocation2 [shape = 'u8[2048]{0}', space=vmem, size = 0x800, scoped, tag = 'input window, operand 0, single buffered']
    #allocation3 [shape = 's32[1]{0}', space=sflag, size = 0x4, scoped, tag = 'scoped memory for tpu_custom_call.1']
    #allocation4 [shape = 's32[1]{0}', space=sflag, size = 0x4, scoped, tag = 'scoped memory for tpu_custom_call.1']
    #allocation5 [shape = 'u8[2048]{0}', space=vmem, size = 0x800, scoped, tag = 'output window, operand 0, single buffered']
    %6 = vsyncpa [#allocation3], 0
    %7 = vsyncpa [#allocation4], 0
    // Predicated region
    $region2: #{tpu_custom_call.1} parent=1 // pred_check
      _
    $region3: #{tpu_custom_call.1} parent=1 // pred_check_branch
      %9 = sbr.rel (0) target = $region5
    $region4: #{tpu_custom_call.1} parent=1 // pred_region
      %s11 = ssub.s32 64, 64
      %12 = vsyncadd [#allocation3], %s11
      %s14 = sshll.u32 [#allocation2], 4
      %s15 = int_to_ptr.vmem [resolvable:$true] %s14
      %17 = dma.hbm_to_vmem [thread:$0]  %s0, 64, %s15, [#allocation3]
    $region5: #{tpu_custom_call.1} parent=1 // pred_fallthru
      _
    // Predicated region
    $region6: #{tpu_custom_call.1} parent=1 // pred_check
      _
    $region7: #{tpu_custom_call.1} parent=1 // pred_check_branch
      %19 = sbr.rel (0) target = $region9
    $region8: #{tpu_custom_call.1} parent=1 // pred_region
      %20 = dma.done [#allocation3], 64
    $region9: #{tpu_custom_call.1} parent=1 // pred_fallthru
      _
    %v21 = vld [vmem:[#allocation2] sm:$0xf]
    %v22 = vlaneseq
    %v23 = vand.u32 %v22, 127
    %v24 = vadd.s32 %v23, 128
    %vm25 = vcmp.lt.s32.totalorder %v23, 0
    %v26 = vsub.s32 0, %v23
    %v27 = vsel %vm25, %v26, %v23
    %v28 = vshrl.u32 %v27, 4
    %v29 = vand.u32 %v27, 15
    %v30 = vsub.s32 0, %v29
    %v31 = vsel %vm25, %v30, %v29
    %vm32 = vcmp.lt.s32.totalorder %v24, 0
    %v33 = vsub.s32 0, %v24
    %v34 = vsel %vm32, %v33, %v24
    %v35 = vshrl.u32 %v34, 4
    %v36 = vand.u32 %v34, 15
    %v37 = vsub.s32 0, %v36
    %v38 = vsel %vm32, %v37, %v36
    %vm39 = vcmp.ne.s32.totalorder %v31, 0
    %vm40 = vcmp.ne.s32.totalorder %v38, 0
    %vm41 = vcmp.lt.s32.totalorder %v31, 0
    %vm42 = vcmp.lt.s32.totalorder %v38, 0
    %vm43 = vmand %vm41, %vm39
    %vm44 = vmand %vm42, %vm40
    %v45 = vadd.s32 %v31, 16
    %v46 = vadd.s32 %v38, 16
    %v47 = vsel %vm43, %v45, %v31
    %v48 = vsel %vm44, %v46, %v38
    %vm49 = vcmp.eq.s32.totalorder %v47, 0
    %vm50 = vcmp.eq.s32.totalorder %v48, 0
    %vm51 = vcmp.eq.s32.totalorder %v47, 15
    %vm52 = vcmp.eq.s32.totalorder %v48, 15
    %vm53 = vcmp.lt.s32.totalorder %v23, 16
    %vm54 = vcmp.lt.s32.totalorder %v24, 16
    %vm55 = vcmp.ge.s32.totalorder %v23, 240
    %vm56 = vcmp.ge.s32.totalorder %v24, 240
    %v59 = vunpack.c.l.s4 1983009808
    %v60 = vunpack.c.0.s8 %v59
    %v61 = vlaneseq
    %v62 = vshrl.u32 %v61, 7
    %v63 = vsub.s32 %v60, %v62
    %v64 = vrot.slane %v21, %v63
    %v65 = vcombine.high %v64, %v64
    %68 = vrot.lane.b32.xlu0 %v64, 1
    %v69 = vpop.permute.xlu0 %68
    %70 = vrot.lane.b32.xlu0 %v65, 1
    %v71 = vpop.permute.xlu0 %70
    %vm72 = vcmp.lt.s32.totalorder %v23, 1
    %v73 = vsel %vm72, %v69, %v71
    %v74 = vsel %vm72, %v71, %v69
    %v75 = vsel %vm49, 1, 0
    %v76 = vsel %vm50, 1, 0
    %vm77 = vcmp.eq.s32.totalorder %v75, 1
    %vm78 = vcmp.eq.s32.totalorder %v76, 1
    %v79 = vsel %vm77, 0.0, %v74
    %v80 = vsel %vm78, 0.0, %v73
    %81 = vrot.lane.b32.xlu0 %v64, 127
    %v82 = vpop.permute.xlu0 %81
    %83 = vrot.lane.b32.xlu0 %v65, 127
    %v84 = vpop.permute.xlu0 %83
    %vm85 = vcmp.lt.s32.totalorder %v23, 127
    %v86 = vsel %vm85, %v82, %v84
    %v87 = vsel %vm85, %v84, %v82
    %v88 = vsel %vm51, 1, 0
    %v89 = vsel %vm52, 1, 0
    %vm90 = vcmp.eq.s32.totalorder %v88, 1
    %vm91 = vcmp.eq.s32.totalorder %v89, 1
    %v92 = vsel %vm90, 0.0, %v86
    %v93 = vsel %vm91, 0.0, %v87
    %v94 = vsub.f32 %v92, %v79
    %v95 = vsub.f32 %v93, %v80
    %v96 = vmul.f32 %v21, 2.0
    %v99 = vunpack.c.l.s4 1983009808
    %v100 = vunpack.c.0.s8 %v99
    %v101 = vlaneseq
    %v102 = vshrl.u32 %v101, 7
    %v103 = vsub.s32 %v100, %v102
    %v104 = vrot.slane %v96, %v103
    %v105 = vcombine.high %v104, %v104
    %v108 = vadd.f32 %v79, %v104
    %v109 = vadd.f32 %v80, %v105
    %v110 = vadd.f32 %v108, %v92
    %v111 = vadd.f32 %v109, %v93
    %112 = vrot.lane.b32.xlu0 %v94, 16
    %v113 = vpop.permute.xlu0 %112
    %114 = vrot.lane.b32.xlu0 %v95, 16
    %v115 = vpop.permute.xlu0 %114
    %v116 = vsel %vm53, %v113, %v115
    %v117 = vsel %vm53, %v115, %v113
    %v118 = vsel %vm53, 1, 0
    %v119 = vsel %vm54, 1, 0
    %vm120 = vcmp.eq.s32.totalorder %v118, 1
    %vm121 = vcmp.eq.s32.totalorder %v119, 1
    %v122 = vsel %vm120, 0.0, %v117
    %v123 = vsel %vm121, 0.0, %v116
    %124 = vrot.lane.b32.xlu0 %v94, 112
    %v125 = vpop.permute.xlu0 %124
    %126 = vrot.lane.b32.xlu0 %v95, 112
    %v127 = vpop.permute.xlu0 %126
    %vm128 = vcmp.lt.s32.totalorder %v23, 112
    %v129 = vsel %vm128, %v125, %v127
    %v130 = vsel %vm128, %v127, %v125
    %v131 = vsel %vm55, 1, 0
    %v132 = vsel %vm56, 1, 0
    %vm133 = vcmp.eq.s32.totalorder %v131, 1
    %vm134 = vcmp.eq.s32.totalorder %v132, 1
    %v135 = vsel %vm133, 0.0, %v129
    %v136 = vsel %vm134, 0.0, %v130
    %v137 = vmul.f32 %v94, 2.0
    %v138 = vmul.f32 %v95, 2.0
    %v139 = vadd.f32 %v122, %v137
    %v140 = vadd.f32 %v123, %v138
    %v141 = vadd.f32 %v139, %v135
    %v142 = vadd.f32 %v140, %v136
    %v143 = vand.u32 2147483647, %v141
    %v144 = vand.u32 2147483647, %v142
    %145 = vrot.lane.b32.xlu0 %v110, 16
    %v146 = vpop.permute.xlu0 %145
    %147 = vrot.lane.b32.xlu0 %v111, 16
    %v148 = vpop.permute.xlu0 %147
    %v149 = vsel %vm53, %v146, %v148
    %v150 = vsel %vm53, %v148, %v146
    %v151 = vsel %vm120, 0.0, %v150
    %v152 = vsel %vm121, 0.0, %v149
    %153 = vrot.lane.b32.xlu0 %v110, 112
    %v154 = vpop.permute.xlu0 %153
    %155 = vrot.lane.b32.xlu0 %v111, 112
    %v156 = vpop.permute.xlu0 %155
    %v157 = vsel %vm128, %v154, %v156
    %v158 = vsel %vm128, %v156, %v154
    %v159 = vsel %vm133, 0.0, %v157
    %v160 = vsel %vm134, 0.0, %v158
    %v161 = vsub.f32 %v151, %v159
    %v162 = vsub.f32 %v152, %v160
    %v163 = vand.u32 2147483647, %v161
    %v164 = vand.u32 2147483647, %v162
    %v165 = vadd.f32 %v143, %v163
    %v166 = vadd.f32 %v144, %v164
    %v169 = vcombine.low %v165, %v166
    %v171 = vunpack.c.l.s4 1983009808
    %v172 = vunpack.c.0.s8 %v171
    %v173 = vlaneseq
    %v174 = vshrl.u32 %v173, 7
    %v175 = vsub.s32 %v172, %v174
    %v176 = vrot.slane %v169, %v175
    %178 = vst [vmem:[#allocation5] sm:$0xf] %v176
    // Predicated region
    $region10: #{tpu_custom_call.1} parent=1 // pred_check
      _
    $region11: #{tpu_custom_call.1} parent=1 // pred_check_branch
      %180 = sbr.rel (0) target = $region13
    $region12: #{tpu_custom_call.1} parent=1 // pred_region
      %s182 = ssub.s32 64, 64
      %183 = vsyncadd [#allocation4], %s182
      %s185 = sshll.u32 [#allocation5], 4
      %s186 = int_to_ptr.vmem [resolvable:$true] %s185
      %188 = dma.vmem_to_hbm [thread:$0]  %s186, 64, %s1, [#allocation4]
    $region13: #{tpu_custom_call.1} parent=1 // pred_fallthru
      _
    // Predicated region
    $region14: #{tpu_custom_call.1} parent=1 // pred_check
      _
    $region15: #{tpu_custom_call.1} parent=1 // pred_check_branch
      %190 = sbr.rel (0) target = $region17
    $region16: #{tpu_custom_call.1} parent=1 // pred_region
      %191 = dma.done [#allocation4], 64
    $region17: #{tpu_custom_call.1} parent=1 // pred_fallthru
      _
    %192 = vsyncpa [#allocation3], 1
    %193 = vsyncpa [#allocation4], 1

</llo_original>
